<compile_context>
chip_gen: v7x
topology: tpu7x:2x2x1
jax: 0.10.0
libtpu: 0.0.40
codegen_flags: <defaults>
</compile_context>

<pallas_src>
import functools

import jax
import jax.numpy as jnp
from jax.experimental import pallas as pl
from jax.experimental.pallas import tpu as pltpu


def _round_up(x: int, m: int) -> int:
    return ((x + m - 1) // m) * m


def _vmem_limit_bytes() -> int:
    """Generation-aware scoped-VMEM limit (7/8 of per-core capacity, capped)."""
    try:
        cap = int(pltpu.get_tpu_info().vmem_capacity_bytes)
    except Exception:
        cap = 64 * 1024 * 1024  # conservative fallback (fits every generation)
    return min((cap * 7) // 8, 112 * 1024 * 1024)


# Live f32 (TB, V) temporaries at peak inside the kernel (d, e1/e2, col, dt, et, diff).
_NUM_F32_TEMPS = 6


def _choose_token_block(n: int, v: int, in_itemsize: int, vmem_limit: int) -> int:
    """Largest packing-aligned token tile that fits the pipeline in VMEM.

    Budget: 2 inputs x 2 pipeline buffers x (tb, V) in input dtype, plus
    _NUM_F32_TEMPS f32 (tb, V) compute temporaries, against 80% of the scoped
    VMEM limit.  Also capped so the token grid has >= 2 blocks (v7x megacore).
    """
    # sublane packing granularity: 8 rows for 4B dtypes, 16 for 2B, 32 for 1B
    gran = max(8, 32 // max(in_itemsize, 1))
    bytes_per_row = v * (2 * 2 * in_itemsize + _NUM_F32_TEMPS * 4) + 128
    tb = int((vmem_limit * 4 // 5) // max(bytes_per_row, 1))
    tb = (tb // gran) * gran
    tb = max(gran, min(tb, 2048))
    # keep at least 2 grid blocks so both v7x TensorCores get work
    tb = min(tb, _round_up(pl.cdiv(n, 2), gran))
    tb = min(tb, _round_up(n, gran))
    return tb


def _kd_kernel(logits_ref, teacher_ref, tgt_ref, hard_ref, soft_ref, *,
               ignore_index: int, inv_temp: float, temp_is_one: bool):
    """Per-token cross-entropy and KL(teacher || student) over the vocab (lane) axis.

    Block shapes:
      logits_ref / teacher_ref : (TB, V)  input dtype (cast to f32 on load)
      tgt_ref                  : (TB, 1)  int32
      hard_ref / soft_ref      : (TB, 1)  float32
    """
    tgt = tgt_ref[...]                               # (TB, 1) int32

    # ---- student: one max + one centered copy; only `d` stays live downstream ----
    x = logits_ref[...].astype(jnp.float32)
    mx = jnp.max(x, axis=-1, keepdims=True)
    d = x - mx                                       # (TB, V)
    e1 = jnp.exp(d)
    log_s1 = jnp.log(jnp.sum(e1, axis=-1, keepdims=True))

    # hard cross-entropy: logsumexp(x) - x[target] = log_s1 - d[target]
    col = jax.lax.broadcasted_iota(jnp.int32, d.shape, 1)        # (TB, V)
    tgt_d = jnp.sum(jnp.where(col == tgt, d, 0.0), axis=-1, keepdims=True)
    ce = log_s1 - tgt_d
    hard_ref[...] = jnp.where(tgt == ignore_index, 0.0, ce)

    # student temperature-scaled quantities: only ds and its log-normalizer needed
    if temp_is_one:
        ds = d
        log_s2 = log_s1                              # reuse the hard-CE normalizer
    else:
        ds = d * inv_temp
        log_s2 = jnp.log(jnp.sum(jnp.exp(ds), axis=-1, keepdims=True))

    # ---- teacher: single exp pass, no V-wide divide, no log_p / log_q temps ----
    t = teacher_ref[...].astype(jnp.float32)
    mt = jnp.max(t, axis=-1, keepdims=True)
    dt = (t - mt) if temp_is_one else (t - mt) * inv_temp
    et = jnp.exp(dt)
    zt = jnp.sum(et, axis=-1, keepdims=True)         # (TB, 1)
    inv_zt = pl.reciprocal(zt, approx=False)         # exact per-row recip (cheap)

    # KL(p || q) = sum(p * (log_p - log_q))
    #            = inv_zt * sum(et * (dt - ds)) + (log_s2 - log(zt))
    kl_num = jnp.sum(et * (dt - ds), axis=-1, keepdims=True)
    soft_ref[...] = kl_num * inv_zt + (log_s2 - jnp.log(zt))


def _per_token_losses(logits_2d, teacher_2d, targets_2d, *,
                      ignore_index: int, temperature: float, token_block: int,
                      vmem_limit: int):
    """Run the Pallas kernel over token tiles. Inputs: (N,V), (N,V), (N,1)."""
    n, v = logits_2d.shape
    n_blocks = pl.cdiv(n, token_block)
    temp_is_one = float(temperature) == 1.0

    kernel = functools.partial(
        _kd_kernel,
        ignore_index=int(ignore_index),
        inv_temp=float(1.0 / temperature),
        temp_is_one=temp_is_one)

    # NOTE: per-token outputs stay (TB, 1); output traffic is ~1/V of input traffic,
    # so the masked width-1 stores are negligible here.
    # TODO(synk): if an xprof trace on v5e/v6e shows exposed input DMA, sweep
    # pipeline depth with pipeline_mode=pl.Buffered(3) on the two (TB, V) inputs.
    hard, soft = pl.pallas_call(
        kernel,
        out_shape=(jax.ShapeDtypeStruct((n, 1), jnp.float32),
                   jax.ShapeDtypeStruct((n, 1), jnp.float32)),
        grid_spec=pltpu.PrefetchScalarGridSpec(
            num_scalar_prefetch=0,
            grid=(n_blocks,),
            in_specs=[
                pl.BlockSpec((token_block, v), lambda i: (i, 0)),
                pl.BlockSpec((token_block, v), lambda i: (i, 0)),
                pl.BlockSpec((token_block, 1), lambda i: (i, 0)),
            ],
            out_specs=[
                pl.BlockSpec((token_block, 1), lambda i: (i, 0)),
                pl.BlockSpec((token_block, 1), lambda i: (i, 0)),
            ],
        ),
        compiler_params=pltpu.CompilerParams(
            dimension_semantics=("parallel",),
            vmem_limit_bytes=vmem_limit),
    )(logits_2d, teacher_2d, targets_2d)
    return hard[:, 0], soft[:, 0]


def knowledge_distillation_loss(logits, targets, teacher_logits,
                                attention_mask=None, *,
                                temperature: float = 1.0,
                                alpha: float = 0.5,
                                ignore_index: int = -100,
                                reduction: str = "mean"):
    """JAX/Pallas equivalent of KnowledgeDistillationLoss.forward."""
    b, s, v = logits.shape
    n = b * s

    # Pass the original dtype straight into the kernel (no f32 copies in HBM);
    # the kernel casts to f32 internally (required on v5e: no bf16 VPU/EUP path).
    logits_2d = logits.reshape(n, v)
    teacher_2d = teacher_logits.reshape(n, v)
    targets_2d = targets.reshape(n, 1).astype(jnp.int32)

    vmem_limit = _vmem_limit_bytes()
    token_block = _choose_token_block(
        n, v, jnp.dtype(logits.dtype).itemsize, vmem_limit)

    hard_tok, kl_tok = _per_token_losses(
        logits_2d, teacher_2d, targets_2d,
        ignore_index=ignore_index, temperature=temperature,
        token_block=token_block, vmem_limit=vmem_limit)

    soft_tok = (temperature ** 2) * kl_tok  # per-token soft loss, (N,)

    # ----- reductions (pure-JAX glue over (N,) arrays, matches the PyTorch branches) -----
    if attention_mask is not None:
        mask = attention_mask.reshape(n).astype(jnp.float32)
        msum = jnp.sum(mask)
        hard_masked = hard_tok * mask
        soft_masked = soft_tok * mask
        if reduction == "mean":
            hard_loss = jnp.where(msum > 0, jnp.sum(hard_masked) / msum, 0.0)
            soft_loss = jnp.where(msum > 0, jnp.sum(soft_masked) / msum, 0.0)
        elif reduction == "sum":
            hard_loss = jnp.sum(hard_masked)
            soft_loss = jnp.sum(soft_masked)
        else:  # 'none'
            hard_loss = hard_masked.reshape(b, s)
            soft_loss = soft_tok.reshape(b, s) * attention_mask.astype(jnp.float32)
    else:
        if reduction == "mean":
            # matches torch module: F.cross_entropy(reduction='none').mean() over ALL tokens
            hard_loss = jnp.mean(hard_tok)
            soft_loss = jnp.mean(soft_tok)
        elif reduction == "sum":
            hard_loss = jnp.sum(hard_tok)
            soft_loss = jnp.sum(soft_tok)
        else:
            hard_loss = hard_tok.reshape(b, s)
            soft_loss = soft_tok.reshape(b, s)

    if alpha > 0.0:
        total_loss = (1.0 - alpha) * hard_loss + alpha * soft_loss
        return {"loss": total_loss, "hard_loss": hard_loss, "soft_loss": soft_loss}
    else:
        return hard_loss


# ---------------------------------------------------------------------------
# reference + smoke test
# ---------------------------------------------------------------------------
def _reference_loss(logits, targets, teacher_logits, attention_mask,
                    temperature, alpha, ignore_index=-100):
    b, s, v = logits.shape
    x = logits.reshape(-1, v).astype(jnp.float32)
    t = teacher_logits.reshape(-1, v).astype(jnp.float32)
    tg = targets.reshape(-1)
    lse = jax.nn.logsumexp(x, axis=-1)
    gathered = jnp.take_along_axis(x, jnp.clip(tg, 0, v - 1)[:, None], axis=-1)[:, 0]
    ce = jnp.where(tg == ignore_index, 0.0, lse - gathered)
    lq = jax.nn.log_softmax(x / temperature, axis=-1)
    lp = jax.nn.log_softmax(t / temperature, axis=-1)
    kl = jnp.sum(jnp.exp(lp) * (lp - lq), axis=-1)
    soft = (temperature ** 2) * kl
    if attention_mask is not None:
        m = attention_mask.reshape(-1).astype(jnp.float32)
        hard_l = jnp.sum(ce * m) / jnp.sum(m)
        soft_l = jnp.sum(soft * m) / jnp.sum(m)
    else:
        hard_l = jnp.mean(ce)
        soft_l = jnp.mean(soft)
    return (1.0 - alpha) * hard_l + alpha * soft_l


if __name__ == "__main__":
    # Small synthetic shapes: batch=2, seq=8, vocab=32
    B, S, V = 2, 8, 32
    key = jax.random.PRNGKey(0)
    k1, k2, k3, k4 = jax.random.split(key, 4)

    logits = jax.random.normal(k1, (B, S, V), dtype=jnp.float32)
    teacher_logits = jax.random.normal(k2, (B, S, V), dtype=jnp.float32)
    targets = jax.random.randint(k3, (B, S), 0, V, dtype=jnp.int32)
    targets = targets.at[0, 0].set(-100)  # exercise ignore_index path
    attention_mask = (jax.random.uniform(k4, (B, S)) > 0.2).astype(jnp.int32)

    # --- test 1: f32 inputs, T=2.0, masked mean ---
    out = knowledge_distillation_loss(
        logits, targets, teacher_logits, attention_mask,
        temperature=2.0, alpha=0.5, ignore_index=-100, reduction="mean")
    out = jax.tree_util.tree_map(jax.block_until_ready, out)
    ref = _reference_loss(logits, targets, teacher_logits, attention_mask, 2.0, 0.5)
    assert jnp.allclose(out["loss"], ref, atol=1e-5, rtol=1e-5), (out["loss"], ref)

    # --- test 2: f32 inputs, T=1.0 fast path, unmasked mean ---
    out1 = knowledge_distillation_loss(
        logits, targets, teacher_logits, None,
        temperature=1.0, alpha=0.5, ignore_index=-100, reduction="mean")
    out1 = jax.tree_util.tree_map(jax.block_until_ready, out1)
    ref1 = _reference_loss(logits, targets, teacher_logits, None, 1.0, 0.5)
    assert jnp.allclose(out1["loss"], ref1, atol=1e-5, rtol=1e-5), (out1["loss"], ref1)

    # --- test 3: bf16 inputs fed directly to the kernel (no wrapper up-cast) ---
    logits_bf16 = logits.astype(jnp.bfloat16)
    teacher_bf16 = teacher_logits.astype(jnp.bfloat16)
    out_bf = knowledge_distillation_loss(
        logits_bf16, targets, teacher_bf16, attention_mask,
        temperature=2.0, alpha=0.5, ignore_index=-100, reduction="mean")
    out_bf = jax.tree_util.tree_map(jax.block_until_ready, out_bf)
    ref_bf = _reference_loss(logits_bf16, targets, teacher_bf16, attention_mask, 2.0, 0.5)
    assert jnp.allclose(out_bf["loss"], ref_bf, atol=1e-4, rtol=1e-4), (out_bf["loss"], ref_bf)

    # --- test 4: 'none' reduction shape + alpha=0 (hard-only) path ---
    out_none = knowledge_distillation_loss(
        logits, targets, teacher_logits, attention_mask,
        temperature=2.0, alpha=0.5, ignore_index=-100, reduction="none")
    out_none = jax.tree_util.tree_map(jax.block_until_ready, out_none)
    assert out_none["loss"].shape == (B, S)
    hard_only = knowledge_distillation_loss(
        logits, targets, teacher_logits, attention_mask,
        temperature=2.0, alpha=0.0, ignore_index=-100, reduction="mean")
    jax.block_until_ready(hard_only)

    print("KERNEL_OK")
</pallas_src>

<mosaic_0001>
module attributes {stable_mosaic.version = 11 : i64} {
  func.func @_kd_kernel(%arg0: i32, %arg1: memref<8x32xf32, #tpu.memory_space<vmem>>, %arg2: memref<8x32xf32, #tpu.memory_space<vmem>>, %arg3: memref<8x1xi32, #tpu.memory_space<vmem>>, %arg4: memref<8x1xf32, #tpu.memory_space<vmem>>, %arg5: memref<8x1xf32, #tpu.memory_space<vmem>>) attributes {dimension_semantics = [#tpu.dimension_semantics<parallel>], iteration_bounds = array<i64: 2>, scalar_prefetch = 0 : i64, scratch_operands = 0 : i64, tpu.core_type = #tpu.core_type<tc>, window_params = [{transform_indices = @transform_0, window_bounds = array<i64: 8, 32>}, {transform_indices = @transform_1, window_bounds = array<i64: 8, 32>}, {transform_indices = @transform_2, window_bounds = array<i64: 8, 1>}, {transform_indices = @transform_3, window_bounds = array<i64: 8, 1>}, {transform_indices = @transform_4, window_bounds = array<i64: 8, 1>}]} {
    %c0 = arith.constant 0 : index
    %c0_0 = arith.constant 0 : index
    %0 = vector.load %arg3[%c0, %c0_0] : memref<8x1xi32, #tpu.memory_space<vmem>>, vector<8x1xi32>
    %c0_1 = arith.constant 0 : index
    %c0_2 = arith.constant 0 : index
    %1 = vector.load %arg1[%c0_1, %c0_2] : memref<8x32xf32, #tpu.memory_space<vmem>>, vector<8x32xf32>
    %cst = arith.constant dense<0xFF800000> : vector<8xf32>
    %2 = vector.multi_reduction <maximumf>, %1, %cst [1] : vector<8x32xf32> to vector<8xf32>
    %3 = vector.shape_cast %2 : vector<8xf32> to vector<8x1xf32>
    %4 = vector.broadcast %3 : vector<8x1xf32> to vector<8x32xf32>
    %5 = arith.subf %1, %4 : vector<8x32xf32>
    %6 = math.exp %5 : vector<8x32xf32>
    %cst_3 = arith.constant dense<0.000000e+00> : vector<8xf32>
    %7 = vector.multi_reduction <add>, %6, %cst_3 [1] : vector<8x32xf32> to vector<8xf32>
    %8 = vector.shape_cast %7 : vector<8xf32> to vector<8x1xf32>
    %9 = math.log %8 : vector<8x1xf32>
    %10 = tpu.iota {dimensions = array<i32: 1>} : vector<8x32xi32>
    %11 = vector.broadcast %0 : vector<8x1xi32> to vector<8x32xi32>
    %12 = arith.cmpi eq, %10, %11 : vector<8x32xi32>
    %cst_4 = arith.constant 0.000000e+00 : f32
    %13 = vector.broadcast %cst_4 : f32 to vector<8x32xf32>
    %14 = arith.select %12, %5, %13 : vector<8x32xi1>, vector<8x32xf32>
    %cst_5 = arith.constant dense<0.000000e+00> : vector<8xf32>
    %15 = vector.multi_reduction <add>, %14, %cst_5 [1] : vector<8x32xf32> to vector<8xf32>
    %16 = vector.shape_cast %15 : vector<8xf32> to vector<8x1xf32>
    %17 = arith.subf %9, %16 : vector<8x1xf32>
    %c-100_i32 = arith.constant -100 : i32
    %18 = vector.broadcast %c-100_i32 : i32 to vector<8x1xi32>
    %19 = arith.cmpi eq, %0, %18 : vector<8x1xi32>
    %cst_6 = arith.constant 0.000000e+00 : f32
    %20 = vector.broadcast %cst_6 : f32 to vector<8x1xf32>
    %21 = arith.select %19, %20, %17 : vector<8x1xi1>, vector<8x1xf32>
    %c0_7 = arith.constant 0 : index
    %c0_8 = arith.constant 0 : index
    %22 = vector.load %arg4[%c0_7, %c0_8] : memref<8x1xf32, #tpu.memory_space<vmem>>, vector<8x1xf32>
    tpu.vector_store %arg4[%c0_7, %c0_8], %21 {strides = array<i32>} : memref<8x1xf32, #tpu.memory_space<vmem>>, vector<8x1xf32>,
    %cst_9 = arith.constant 5.000000e-01 : f32
    %23 = vector.broadcast %cst_9 : f32 to vector<8x32xf32>
    %24 = arith.mulf %5, %23 : vector<8x32xf32>
    %25 = math.exp %24 : vector<8x32xf32>
    %cst_10 = arith.constant dense<0.000000e+00> : vector<8xf32>
    %26 = vector.multi_reduction <add>, %25, %cst_10 [1] : vector<8x32xf32> to vector<8xf32>
    %27 = vector.shape_cast %26 : vector<8xf32> to vector<8x1xf32>
    %28 = math.log %27 : vector<8x1xf32>
    %c0_11 = arith.constant 0 : index
    %c0_12 = arith.constant 0 : index
    %29 = vector.load %arg2[%c0_11, %c0_12] : memref<8x32xf32, #tpu.memory_space<vmem>>, vector<8x32xf32>
    %cst_13 = arith.constant dense<0xFF800000> : vector<8xf32>
    %30 = vector.multi_reduction <maximumf>, %29, %cst_13 [1] : vector<8x32xf32> to vector<8xf32>
    %31 = vector.shape_cast %30 : vector<8xf32> to vector<8x1xf32>
    %32 = vector.broadcast %31 : vector<8x1xf32> to vector<8x32xf32>
    %33 = arith.subf %29, %32 : vector<8x32xf32>
    %cst_14 = arith.constant 5.000000e-01 : f32
    %34 = vector.broadcast %cst_14 : f32 to vector<8x32xf32>
    %35 = arith.mulf %33, %34 : vector<8x32xf32>
    %36 = math.exp %35 : vector<8x32xf32>
    %cst_15 = arith.constant dense<0.000000e+00> : vector<8xf32>
    %37 = vector.multi_reduction <add>, %36, %cst_15 [1] : vector<8x32xf32> to vector<8xf32>
    %38 = vector.shape_cast %37 : vector<8xf32> to vector<8x1xf32>
    %39 = tpu.reciprocal %38 : vector<8x1xf32> -> vector<8x1xf32>
    %40 = arith.subf %35, %24 : vector<8x32xf32>
    %41 = arith.mulf %36, %40 : vector<8x32xf32>
    %cst_16 = arith.constant dense<0.000000e+00> : vector<8xf32>
    %42 = vector.multi_reduction <add>, %41, %cst_16 [1] : vector<8x32xf32> to vector<8xf32>
    %43 = vector.shape_cast %42 : vector<8xf32> to vector<8x1xf32>
    %44 = arith.mulf %43, %39 : vector<8x1xf32>
    %45 = math.log %38 : vector<8x1xf32>
    %46 = arith.subf %28, %45 : vector<8x1xf32>
    %47 = arith.addf %44, %46 : vector<8x1xf32>
    %c0_17 = arith.constant 0 : index
    %c0_18 = arith.constant 0 : index
    %48 = vector.load %arg5[%c0_17, %c0_18] : memref<8x1xf32, #tpu.memory_space<vmem>>, vector<8x1xf32>
    tpu.vector_store %arg5[%c0_17, %c0_18], %47 {strides = array<i32>} : memref<8x1xf32, #tpu.memory_space<vmem>>, vector<8x1xf32>,
    return
  }
  func.func @transform_0(%arg0: i32) -> (i32, i32) {
    %c0_i32 = arith.constant 0 : i32
    %c0_i32_0 = arith.constant 0 : i32
    return %arg0, %c0_i32 : i32, i32
  }
  func.func @transform_1(%arg0: i32) -> (i32, i32) {
    %c0_i32 = arith.constant 0 : i32
    %c0_i32_0 = arith.constant 0 : i32
    return %arg0, %c0_i32 : i32, i32
  }
  func.func @transform_2(%arg0: i32) -> (i32, i32) {
    %c0_i32 = arith.constant 0 : i32
    %c0_i32_0 = arith.constant 0 : i32
    return %arg0, %c0_i32 : i32, i32
  }
  func.func @transform_3(%arg0: i32) -> (i32, i32) {
    %c0_i32 = arith.constant 0 : i32
    %c0_i32_0 = arith.constant 0 : i32
    return %arg0, %c0_i32 : i32, i32
  }
  func.func @transform_4(%arg0: i32) -> (i32, i32) {
    %c0_i32 = arith.constant 0 : i32
    %c0_i32_0 = arith.constant 0 : i32
    return %arg0, %c0_i32 : i32, i32
  }
}

</mosaic_0001>

<llo_original>
// kernel: tpu_custom_call.1
$region0: #{tpu_custom_call.1}
  #allocation0 [shape = 'u32[]', space=smem, size = 0x4, offset = 0x4, fixed_abs, tag = 'smem constant byte address 0x4 - core index']
  #allocation1 [shape = 'u32[144,128]{1,0:T(1,128)}', space=vmem, size = 0x12000, scoped, tag = 'internal scratch']
  %s0 = inlined_call_operand.vmem [shape: f32[16,32], index: 0, kind: input, shape index: {}]
  %s1 = inlined_call_operand.hbm [shape: f32[16,32], index: 1, kind: input, shape index: {}]
  %s2 = inlined_call_operand.vmem [shape: s32[16,1], index: 2, kind: input, shape index: {}]
  %s3 = inlined_call_operand.vmem [shape: f32[16,1], index: 3, kind: output, shape index: {0}]
  %s4 = inlined_call_operand.vmem [shape: f32[16,1], index: 4, kind: output, shape index: {1}]
  %5 = xla_tuple %s3, %s4
  %s6 = sld [smem:[#allocation0]]
  $region57: #{tpu_custom_call.1} parent=0
    _
  %s8 = ssub.s32 1, %s6
  %s9 = scalar_select 0, %s8, %s6
  $region1: #{tpu_custom_call.1} parent=0
    #allocation2 [shape = 'u8[8192]{0}', space=vmem, size = 0x2000, scoped, tag = 'input window, operand 1']
    #allocation3 [shape = 's32[2]{0}', space=sflag, size = 0x8, scoped, tag = 'scoped memory for tpu_custom_call.1']
    %10 = vsyncpa [#allocation3], 0
    %s11 = scalar_lea.sflag [#allocation3], 1
    %12 = vsyncpa %s11, 0
    loop: start=0, step=1, limit=4
    $region2: #{tpu_custom_call.1} parent=1 // loop_pre_header
      _
    $region3: #{tpu_custom_call.1} parent=1 // loop_header
      %s14 = sphi 0, %s18
      %p15 = scmp.ge.s32.totalorder %s14, 4
      %s24 = sphi 0, %s26
      %s27 = sphi 0, %s24
      %s28 = sphi 0, %s27
      %s44 = sphi 0, %s28
      %s50 = sphi 0, %s52
      %s53 = sphi 0, %s50
      %s54 = sphi 0, %s53
      %s70 = sphi 0, %s54
      %s76 = sphi 0, %s78
      %s79 = sphi 0, %s76
      %s80 = sphi 0, %s79
      %s96 = sphi 0, %s80
      %s102 = sphi 0, %s104
      %s105 = sphi 0, %s102
      %s106 = sphi 0, %s105
      %s122 = sphi 0, %s106
      %s128 = sphi 0, %s130
      %s131 = sphi 0, %s128
      %s132 = sphi 0, %s131
      %s148 = sphi 0, %s132
    $region4: #{tpu_custom_call.1} parent=1 // loop_header_branch
      %17 = sbr.rel (%p15) target = $region8
    $region5: #{tpu_custom_call.1} parent=1 // loop_body
      %s19 = ssub.s32 %s14, 1
      %s20 = ssub.s32 %s14, 2
      %s21 = sadd.s32 %s14, 1
      %s22 = ssub.s32 %s14, %s21
      %p23 = scmp.eq.s32.totalorder %s22, 0
      %s25 = sadd.s32 %s24, 1
      %s26 = scalar_select %p23, %s24, %s25
      %p29 = pneg %p23
      %p30 = scmp.eq.s32.totalorder %s14, 1
      %p31 = por %p29, %p30
      %p32 = scmp.ne.s32.totalorder %s24, %s27
      %p33 = scmp.eq.s32.totalorder %s14, 0
      %p34 = por %p32, %p33
      %p35 = scmp.ne.s32.totalorder %s24, %s27
      %p36 = scmp.eq.s32.totalorder %s19, 1
      %p37 = por %p35, %p36
      %p38 = scmp.ne.s32.totalorder %s27, %s28
      %p39 = scmp.eq.s32.totalorder %s19, 0
      %p40 = por %p38, %p39
      %p41 = scmp.ne.s32.totalorder %s27, %s28
      %p42 = scmp.eq.s32.totalorder %s20, 1
      %p43 = por %p41, %p42
      %p45 = scmp.ne.s32.totalorder %s28, %s44
      %p46 = scmp.eq.s32.totalorder %s20, 0
      %p47 = por %p45, %p46
      %s48 = ssub.s32 %s14, %s21
      %p49 = scmp.eq.s32.totalorder %s48, 0
      %s51 = sadd.s32 %s50, 1
      %s52 = scalar_select %p49, %s50, %s51
      %p55 = pneg %p49
      %p56 = scmp.eq.s32.totalorder %s14, 1
      %p57 = por %p55, %p56
      %p58 = scmp.ne.s32.totalorder %s50, %s53
      %p59 = scmp.eq.s32.totalorder %s14, 0
      %p60 = por %p58, %p59
      %p61 = scmp.ne.s32.totalorder %s50, %s53
      %p62 = scmp.eq.s32.totalorder %s19, 1
      %p63 = por %p61, %p62
      %p64 = scmp.ne.s32.totalorder %s53, %s54
      %p65 = scmp.eq.s32.totalorder %s19, 0
      %p66 = por %p64, %p65
      %p67 = scmp.ne.s32.totalorder %s53, %s54
      %p68 = scmp.eq.s32.totalorder %s20, 1
      %p69 = por %p67, %p68
      %p71 = scmp.ne.s32.totalorder %s54, %s70
      %p72 = scmp.eq.s32.totalorder %s20, 0
      %p73 = por %p71, %p72
      %s74 = ssub.s32 %s14, %s21
      %p75 = scmp.eq.s32.totalorder %s74, 0
      %s77 = sadd.s32 %s76, 1
      %s78 = scalar_select %p75, %s76, %s77
      %p81 = pneg %p75
      %p82 = scmp.eq.s32.totalorder %s14, 1
      %p83 = por %p81, %p82
      %p84 = scmp.ne.s32.totalorder %s76, %s79
      %p85 = scmp.eq.s32.totalorder %s14, 0
      %p86 = por %p84, %p85
      %p87 = scmp.ne.s32.totalorder %s76, %s79
      %p88 = scmp.eq.s32.totalorder %s19, 1
      %p89 = por %p87, %p88
      %p90 = scmp.ne.s32.totalorder %s79, %s80
      %p91 = scmp.eq.s32.totalorder %s19, 0
      %p92 = por %p90, %p91
      %p93 = scmp.ne.s32.totalorder %s79, %s80
      %p94 = scmp.eq.s32.totalorder %s20, 1
      %p95 = por %p93, %p94
      %p97 = scmp.ne.s32.totalorder %s80, %s96
      %p98 = scmp.eq.s32.totalorder %s20, 0
      %p99 = por %p97, %p98
      %s100 = ssub.s32 %s14, %s21
      %p101 = scmp.eq.s32.totalorder %s100, 0
      %s103 = sadd.s32 %s102, 1
      %s104 = scalar_select %p101, %s102, %s103
      %p107 = pneg %p101
      %p108 = scmp.eq.s32.totalorder %s14, 1
      %p109 = por %p107, %p108
      %p110 = scmp.ne.s32.totalorder %s102, %s105
      %p111 = scmp.eq.s32.totalorder %s14, 0
      %p112 = por %p110, %p111
      %p113 = scmp.ne.s32.totalorder %s102, %s105
      %p114 = scmp.eq.s32.totalorder %s19, 1
      %p115 = por %p113, %p114
      %p116 = scmp.ne.s32.totalorder %s105, %s106
      %p117 = scmp.eq.s32.totalorder %s19, 0
      %p118 = por %p116, %p117
      %p119 = scmp.ne.s32.totalorder %s105, %s106
      %p120 = scmp.eq.s32.totalorder %s20, 1
      %p121 = por %p119, %p120
      %p123 = scmp.ne.s32.totalorder %s106, %s122
      %p124 = scmp.eq.s32.totalorder %s20, 0
      %p125 = por %p123, %p124
      %s126 = ssub.s32 %s14, %s21
      %p127 = scmp.eq.s32.totalorder %s126, 0
      %s129 = sadd.s32 %s128, 1
      %s130 = scalar_select %p127, %s128, %s129
      %p133 = pneg %p127
      %p134 = scmp.eq.s32.totalorder %s14, 1
      %p135 = por %p133, %p134
      %p136 = scmp.ne.s32.totalorder %s128, %s131
      %p137 = scmp.eq.s32.totalorder %s14, 0
      %p138 = por %p136, %p137
      %p139 = scmp.ne.s32.totalorder %s128, %s131
      %p140 = scmp.eq.s32.totalorder %s19, 1
      %p141 = por %p139, %p140
      %p142 = scmp.ne.s32.totalorder %s131, %s132
      %p143 = scmp.eq.s32.totalorder %s19, 0
      %p144 = por %p142, %p143
      %p145 = scmp.ne.s32.totalorder %s131, %s132
      %p146 = scmp.eq.s32.totalorder %s20, 1
      %p147 = por %p145, %p146
      %p149 = scmp.ne.s32.totalorder %s132, %s148
      %p150 = scmp.eq.s32.totalorder %s20, 0
      %p151 = por %p149, %p150
      %p152 = scmp.le.s32.totalorder 1, %s14
      %p153 = scmp.lt.s32.totalorder %s14, 3
      %p154 = pnand %p152, %p153
      %p155 = pneg %p154
      // Predicated region
      $region9: #{tpu_custom_call.1} parent=5 // pred_check
        _
      $region10: #{tpu_custom_call.1} parent=5 // pred_check_branch
        %157 = sbr.rel (%p154) target = $region12
      $region11: #{tpu_custom_call.1} parent=5 // pred_region
        %s158 = ssub.s32 %s14, 1
      $region12: #{tpu_custom_call.1} parent=5 // pred_fallthru
        _
      %p159 = scmp.lt.s32.totalorder %s14, 2
      // Predicated region
      $region13: #{tpu_custom_call.1} parent=5 // pred_check
        %p160 = pneg %p159
      $region14: #{tpu_custom_call.1} parent=5 // pred_check_branch
        %162 = sbr.rel (%p160) target = $region16
      $region15: #{tpu_custom_call.1} parent=5 // pred_region
        // Predicated region
        $region17: #{tpu_custom_call.1} parent=15 // pred_check
          %p163 = pneg %p34
        $region18: #{tpu_custom_call.1} parent=15 // pred_check_branch
          %165 = sbr.rel (%p163) target = $region20
        $region19: #{tpu_custom_call.1} parent=15 // pred_region
          %p166 = scmp.lt.s32.totalorder %s14, 1
          %s167 = scalar_select %p166, %s14, 1
          %s168 = smul.addr %s167, 8
          %s169 = scalar_lea.vmem %s0, %s168
        $region20: #{tpu_custom_call.1} parent=15 // pred_fallthru
          _
        // Predicated region
        $region21: #{tpu_custom_call.1} parent=15 // pred_check
          %p170 = pneg %p60
        $region22: #{tpu_custom_call.1} parent=15 // pred_check_branch
          %172 = sbr.rel (%p170) target = $region24
        $region23: #{tpu_custom_call.1} parent=15 // pred_region
          %s173 = sand.u32 %s50, 1
          %s174 = scalar_lea.sflag [#allocation3], %s173
          %s175 = sand.u32 %s50, 1
          %s176 = smul.addr %s175, 8
          %s177 = scalar_lea.vmem [#allocation2], %s176
          %s179 = ssub.s32 128, 128
          %180 = vsyncadd %s174, %s179
          %s181 = smul.addr %s14, 128
          %s182 = scalar_lea.hbm %s1, %s181
          %s184 = sshll.u32 %s177, 4
          %s185 = int_to_ptr.vmem [resolvable:$true] %s184
          %187 = dma.hbm_to_vmem [thread:$0]  %s182, 128, %s185, %s174
        $region24: #{tpu_custom_call.1} parent=15 // pred_fallthru
          _
        // Predicated region
        $region25: #{tpu_custom_call.1} parent=15 // pred_check
          %p188 = pneg %p86
        $region26: #{tpu_custom_call.1} parent=15 // pred_check_branch
          %190 = sbr.rel (%p188) target = $region28
        $region27: #{tpu_custom_call.1} parent=15 // pred_region
          %p191 = scmp.lt.s32.totalorder %s14, 1
          %s192 = scalar_select %p191, %s14, 1
          %s193 = smul.addr %s192, 8
          %s194 = scalar_lea.vmem %s2, %s193
        $region28: #{tpu_custom_call.1} parent=15 // pred_fallthru
          _
      $region16: #{tpu_custom_call.1} parent=5 // pred_fallthru
        _
      %p195 = scmp.le.s32.totalorder 1, %s14
      %p196 = scmp.lt.s32.totalorder %s14, 3
      %p197 = pnand %p195, %p196
      %p198 = pneg %p197
      // Predicated region
      $region29: #{tpu_custom_call.1} parent=5 // pred_check
        _
      $region30: #{tpu_custom_call.1} parent=5 // pred_check_branch
        %200 = sbr.rel (%p197) target = $region32
      $region31: #{tpu_custom_call.1} parent=5 // pred_region
        %s201 = ssub.s32 %s14, 1
        %s202 = sand.u32 %s53, 1
        %s203 = scalar_lea.sflag [#allocation3], %s202
        %s204 = sand.u32 %s53, 1
        %s205 = smul.addr %s204, 8
        %s206 = scalar_lea.vmem [#allocation2], %s205
        // Predicated region
        $region33: #{tpu_custom_call.1} parent=31 // pred_check
          %p207 = pneg %p66
        $region34: #{tpu_custom_call.1} parent=31 // pred_check_branch
          %209 = sbr.rel (%p207) target = $region36
        $region35: #{tpu_custom_call.1} parent=31 // pred_region
          %210 = dma.done %s203, 128
        $region36: #{tpu_custom_call.1} parent=31 // pred_fallthru
          _
        %p211 = scmp.lt.s32.totalorder %s19, 1
        %s212 = scalar_select %p211, %s19, 1
        %s213 = smul.addr %s212, 8
        %s214 = scalar_lea.vmem %s0, %s213
        %p215 = pneg %p40
        %p216 = pneg %p37
        %s217 = sand.u32 %s53, 1
        %s218 = scalar_lea.sflag [#allocation3], %s217
        %s219 = sand.u32 %s53, 1
        %s220 = smul.addr %s219, 8
        %s221 = scalar_lea.vmem [#allocation2], %s220
        %p222 = pneg %p66
        %p223 = pneg %p63
        %p224 = scmp.lt.s32.totalorder %s19, 1
        %s225 = scalar_select %p224, %s19, 1
        %s226 = smul.addr %s225, 8
        %s227 = scalar_lea.vmem %s2, %s226
        %p228 = pneg %p92
        %p229 = pneg %p89
        %p230 = pneg %p118
        %p231 = pneg %p115
        %p232 = scmp.lt.s32.totalorder %s19, 1
        %s233 = scalar_select %p232, %s19, 1
        %s234 = smul.addr %s233, 8
        %s235 = scalar_lea.vmem %s3, %s234
        %p236 = pneg %p144
        %p237 = pneg %p141
        %p238 = scmp.lt.s32.totalorder %s19, 1
        %s239 = scalar_select %p238, %s19, 1
        %s240 = smul.addr %s239, 8
        %s241 = scalar_lea.vmem %s4, %s240
        %p242 = scmp.lt.s32.totalorder %s19, 1
        %s243 = scalar_select %p242, %s19, 1
        %s244 = smul.addr %s243, 8
        %s245 = scalar_lea.vmem %s0, %s244
        %p246 = scmp.lt.s32.totalorder %s19, 1
        %s247 = scalar_select %p246, %s19, 1
        %s248 = smul.addr %s247, 8
        %s249 = scalar_lea.vmem %s2, %s248
        %p250 = scmp.lt.s32.totalorder %s19, 1
        %s251 = scalar_select %p250, %s19, 1
        %s252 = smul.addr %s251, 8
        %s253 = scalar_lea.vmem %s3, %s252
        %p254 = scmp.lt.s32.totalorder %s19, 1
        %s255 = scalar_select %p254, %s19, 1
        %s256 = smul.addr %s255, 8
        %s257 = scalar_lea.vmem %s4, %s256
        %v258 = vld [vmem:[%s249] sm:$0xff]
        %v259 = vld [vmem:[%s245] sm:$0xff]
        %vm260 = vcmask 261120
        %v261 = vsel %vm260, %v259, -inf
        %262 = vmax.xlane.f32.xlu0 %v261
        %v263 = vpop.xlane.xlu0 %262
        %v264 = vsub.f32 %v259, %v263
        %v265 = vmul.f32 %v264, 1.442695
        %v266 = vpow.pop %v265
        %v267 = vsel %vm260, %v266, 0.0
        %268 = vadd.xlane.f32.xlu0 %v267
        %v269 = vpop.xlane.xlu0 %268
        %v270 = vlog2.pop %v269
        %v271 = vmul.f32 %v270, 0.6931472
        %v272 = vlaneseq
        %v273 = vand.u32 %v272, 127
        %274 = vset.pattern.permute.xlu0 0
        %275 = vperm.xlu0 %274, %v258
        %v276 = vpop.permute.xlu0 %275
        %vm277 = vcmp.eq.s32.totalorder %v273, %v276
        %v278 = vsel %vm277, %v264, 0.0
        %v279 = vsel %vm260, %v278, 0.0
        %280 = vadd.xlane.f32.xlu0 %v279
        %v281 = vpop.xlane.xlu0 %280
        %v282 = vsub.f32 %v271, %v281
        %vm283 = vcmp.eq.s32.totalorder %v258, 4294967196
        %v284 = vsel %vm283, 0.0, %v282
        %vm285 = vcmask 7168
        %286 = vst.msk [vmem:[%s253] sm:$0xff] %vm285, %v284
        %v287 = vmul.f32 %v264, 0.5
        %v288 = vmul.f32 %v287, 1.442695
        %v289 = vpow.pop %v288
        %v290 = vsel %vm260, %v289, 0.0
        %291 = vadd.xlane.f32.xlu0 %v290
        %v292 = vpop.xlane.xlu0 %291
        %v293 = vlog2.pop %v292
        %v294 = vmul.f32 %v293, 0.6931472
        %v295 = vld [vmem:[%s206] sm:$0xff]
        %v296 = vsel %vm260, %v295, -inf
        %297 = vmax.xlane.f32.xlu0 %v296
        %v298 = vpop.xlane.xlu0 %297
        %v299 = vsub.f32 %v295, %v298
        %v300 = vmul.f32 %v299, 0.5
        %v301 = vmul.f32 %v300, 1.442695
        %v302 = vpow.pop %v301
        %v303 = vsel %vm260, %v302, 0.0
        %304 = vadd.xlane.f32.xlu0 %v303
        %v305 = vpop.xlane.xlu0 %304
        %v306 = vrcp.pop %v305
        %v307 = vsub.f32 %v300, %v287
        %v308 = vmul.f32 %v302, %v307
        %v309 = vsel %vm260, %v308, 0.0
        %310 = vadd.xlane.f32.xlu0 %v309
        %v311 = vpop.xlane.xlu0 %310
        %v312 = vmul.f32 %v311, %v306
        %v313 = vlog2.pop %v305
        %v314 = vmul.f32 %v313, 0.6931472
        %v315 = vsub.f32 %v294, %v314
        %v316 = vadd.f32 %v312, %v315
        %317 = vst.msk [vmem:[%s257] sm:$0xff] %vm285, %v316
        %p318 = scmp.lt.s32.totalorder %s19, 1
        %s319 = scalar_select %p318, %s19, 1
        %s320 = smul.addr %s319, 8
        %s321 = scalar_lea.vmem %s3, %s320
        %p322 = scmp.lt.s32.totalorder %s19, 1
        %s323 = scalar_select %p322, %s19, 1
        %s324 = smul.addr %s323, 8
        %s325 = scalar_lea.vmem %s4, %s324
        // Predicated region
        $region37: #{tpu_custom_call.1} parent=31 // pred_check
          %p326 = pneg %p115
        $region38: #{tpu_custom_call.1} parent=31 // pred_check_branch
          %328 = sbr.rel (%p326) target = $region40
        $region39: #{tpu_custom_call.1} parent=31 // pred_region
          _
        $region40: #{tpu_custom_call.1} parent=31 // pred_fallthru
          _
        // Predicated region
        $region41: #{tpu_custom_call.1} parent=31 // pred_check
          %p329 = pneg %p141
        $region42: #{tpu_custom_call.1} parent=31 // pred_check_branch
          %331 = sbr.rel (%p329) target = $region44
        $region43: #{tpu_custom_call.1} parent=31 // pred_region
          _
        $region44: #{tpu_custom_call.1} parent=31 // pred_fallthru
          _
      $region32: #{tpu_custom_call.1} parent=5 // pred_fallthru
        _
      %p332 = scmp.le.s32.totalorder 2, %s14
      // Predicated region
      $region45: #{tpu_custom_call.1} parent=5 // pred_check
        %p333 = pneg %p332
      $region46: #{tpu_custom_call.1} parent=5 // pred_check_branch
        %335 = sbr.rel (%p333) target = $region48
      $region47: #{tpu_custom_call.1} parent=5 // pred_region
        %s336 = ssub.s32 %s14, 2
        // Predicated region
        $region49: #{tpu_custom_call.1} parent=47 // pred_check
          %p337 = pneg %p121
        $region50: #{tpu_custom_call.1} parent=47 // pred_check_branch
          %339 = sbr.rel (%p337) target = $region52
        $region51: #{tpu_custom_call.1} parent=47 // pred_region
          %p340 = scmp.lt.s32.totalorder %s20, 1
          %s341 = scalar_select %p340, %s20, 1
          %s342 = smul.addr %s341, 8
          %s343 = scalar_lea.vmem %s3, %s342
        $region52: #{tpu_custom_call.1} parent=47 // pred_fallthru
          _
        // Predicated region
        $region53: #{tpu_custom_call.1} parent=47 // pred_check
          %p344 = pneg %p147
        $region54: #{tpu_custom_call.1} parent=47 // pred_check_branch
          %346 = sbr.rel (%p344) target = $region56
        $region55: #{tpu_custom_call.1} parent=47 // pred_region
          %p347 = scmp.lt.s32.totalorder %s20, 1
          %s348 = scalar_select %p347, %s20, 1
          %s349 = smul.addr %s348, 8
          %s350 = scalar_lea.vmem %s4, %s349
        $region56: #{tpu_custom_call.1} parent=47 // pred_fallthru
          _
      $region48: #{tpu_custom_call.1} parent=5 // pred_fallthru
        _
    $region6: #{tpu_custom_call.1} parent=1 // loop_footer
      %s18 = sadd.s32 1, %s14
    $region7: #{tpu_custom_call.1} parent=1 // loop_footer_branch
      %13 = sbr.rel target = $region3
    $region8: #{tpu_custom_call.1} parent=1 // loop_exit
      _
    %351 = vsyncpa [#allocation3], 1
    %s352 = scalar_lea.sflag [#allocation3], 1
    %353 = vsyncpa %s352, 1

</llo_original>
